<compile_context>
chip_gen: v6e
topology: v6e:2x2x1
jax: 0.10.0
libtpu: 0.0.40
codegen_flags: <defaults>
</compile_context>

<pallas_src>
import jax
import jax.numpy as jnp
from jax.experimental import pallas as pl
from jax.experimental.pallas import tpu as pltpu


# ---------------- fused Pallas kernel ----------------

def _fused_forward_kernel(x_ref, w_img_ref, txt_ref, o_ref, acc_ref):
    """Grid = (M tiles [parallel], K tiles [arbitrary/reduction]).

    x_ref   : (tm, tk)  f32   image activations tile (cast to bf16 in-kernel)
    w_img   : (tk, E)   bf16  image-encoder weight tile
    txt_ref : (E, n_pad) bf16 pre-normalized, pre-scaled text features^T
    o_ref   : (tm, n_pad) f32 logits tile (lane-dense)
    acc_ref : (tm, E)   f32   VMEM accumulator
    """
    k = pl.program_id(1)

    @pl.when(k == 0)
    def _():
        acc_ref[...] = jnp.zeros_like(acc_ref)

    # image-encoder partial matmul for this K tile: bf16 operands, f32 acc.
    acc_ref[...] += jnp.dot(x_ref[...].astype(jnp.bfloat16), w_img_ref[...],
                            preferred_element_type=jnp.float32)

    @pl.when(k == pl.num_programs(1) - 1)
    def _():
        # L2 normalize image features (rsqrt -> EUP slot).
        # NOTE: eps is added to the squared norm (reference divides by the
        # plain norm); only diverges for near-zero-norm features.
        eps = 1e-12
        img = acc_ref[...]                                       # (tm, E) f32
        img_n = img * jax.lax.rsqrt(
            jnp.sum(img * img, axis=-1, keepdims=True) + eps)

        # scaled cosine logits: bf16 operands -> native MXU rate, f32 acc.
        # exp(logit_scale) is already folded into txt_ref; pad columns of
        # txt_ref are exactly zero, so padded logit columns are zero.
        o_ref[...] = jnp.dot(img_n.astype(jnp.bfloat16), txt_ref[...],
                             preferred_element_type=jnp.float32)


def fused_clip_forward(x_flat, w_img_bf16, txt_scaled_t_bf16, *, tm, tk,
                       vmem_limit_bytes):
    B, F = x_flat.shape
    _, E = w_img_bf16.shape
    _, n_pad = txt_scaled_t_bf16.shape
    mt, kt = B // tm, F // tk
    return pl.pallas_call(
        _fused_forward_kernel,
        grid=(mt, kt),
        in_specs=[
            pl.BlockSpec((tm, tk), lambda i, k: (i, k)),         # x (f32)
            pl.BlockSpec((tk, E), lambda i, k: (k, 0)),          # w_img (bf16)
            pl.BlockSpec((E, n_pad), lambda i, k: (0, 0)),       # txt^T (bf16)
        ],
        out_specs=pl.BlockSpec((tm, n_pad), lambda i, k: (i, 0)),
        out_shape=jax.ShapeDtypeStruct((B, n_pad), jnp.float32),
        scratch_shapes=[pltpu.VMEM((tm, E), jnp.float32)],
        compiler_params=pltpu.CompilerParams(
            dimension_semantics=("parallel", "arbitrary"),
            vmem_limit_bytes=int(vmem_limit_bytes)),
    )(x_flat, w_img_bf16, txt_scaled_t_bf16)


# ---------------- tile / VMEM helpers ----------------

def _round_up(n, m):
    return ((n + m - 1) // m) * m


def _is_v7x():
    try:
        return "v7" in jax.devices()[0].device_kind.lower()
    except Exception:
        return False


def _vmem_limit_bytes():
    """~75% of physical VMEM: ~96 MiB on v5e/v6e (128 MiB), ~48 MiB on v7x (64 MiB)."""
    cap = 64 * 1024 * 1024   # conservative default if query fails
    try:
        info = pltpu.get_tpu_info()
        cap = int(getattr(info, "vmem_capacity_bytes", cap) or cap)
    except Exception:
        pass
    return min(int(cap * 0.75), 100 * 1024 * 1024)


def _tile_footprint_bytes(tm, tk, E, n_pad):
    # double-buffered input/output tiles + resident f32 accumulator
    x_b = tm * tk * 4        # f32 activation tile
    w_b = tk * E * 2         # bf16 weight tile
    t_b = E * n_pad * 2      # bf16 text tile
    o_b = tm * n_pad * 4     # f32 output tile
    return 2 * (x_b + w_b + t_b + o_b) + tm * E * 4


def _pick_tiles(B, F, E, n_pad, vmem_limit):
    # largest M tile that divides B (or B itself if it has no aligned divisor)
    tm = next((c for c in (512, 256, 128, 64, 32, 16, 8) if B % c == 0), B)
    # v7x has 2 TensorCores: make sure the "parallel" M axis has >= 2 tiles
    # (only when the halved tile still satisfies the (8,128) constraint).
    if _is_v7x() and B // tm == 1 and tm % 16 == 0:
        tm //= 2

    budget = int(vmem_limit * 0.6)           # leave headroom for double-buffering
    tk = None
    for c in (4096, 2048, 1024, 512, 256, 128):
        if F % c == 0 and _tile_footprint_bytes(tm, c, E, n_pad) <= budget:
            tk = c
            break
    if tk is None:
        tk = 128 if F % 128 == 0 else F      # small / odd F: full-width block
    # TODO(synk): if profiling on v5e shows exposed DMA on the x/w_img streams,
    # add pipeline_mode=pl.Buffered(3) on those two BlockSpecs.
    return tm, tk


# ---------------- Module wrapper ----------------

class CoOpNegOODPromptPallas:
    """JAX/Pallas re-implementation of CoOp_NegOODPrompt.forward (logits path),
    with PromptLearner ('end' position, dis_aware contexts) semantics."""

    def __init__(self, key, *, n_cls, n_ex_prompts, n_ctx, ctx_dim,
                 seq_len, embed_dim, image_shape):
        C, H, W = image_shape
        ks = jax.random.split(key, 8)
        std = 0.02
        self.n_cls = n_cls
        self.n_ex_prompts = n_ex_prompts
        self.n_ctx = n_ctx
        suffix_len = seq_len - 1 - n_ctx

        # learnable contexts (prompttype='dis_aware', nn.init.normal_(std=0.02))
        self.ctx = std * jax.random.normal(ks[0], (n_ctx, ctx_dim), jnp.float32)
        self.ctx_ood = std * jax.random.normal(ks[1], (n_ctx, ctx_dim), jnp.float32)

        # frozen buffers standing in for clip token_embedding of tokenized prompts
        self.token_prefix = 0.1 * jax.random.normal(ks[2], (n_cls, 1, ctx_dim), jnp.float32)
        self.token_suffix = 0.1 * jax.random.normal(ks[3], (n_cls, suffix_len, ctx_dim), jnp.float32)
        self.ood_token_prefix = 0.1 * jax.random.normal(ks[4], (n_ex_prompts, 1, ctx_dim), jnp.float32)
        self.ood_token_suffix = 0.1 * jax.random.normal(ks[5], (n_ex_prompts, suffix_len, ctx_dim), jnp.float32)

        # TODO(synk): frozen CLIP visual / text transformers approximated by linear maps.
        self.w_img = (1.0 / (C * H * W) ** 0.5) * jax.random.normal(
            ks[6], (C * H * W, embed_dim), jnp.float32)
        self.w_text = (1.0 / ctx_dim ** 0.5) * jax.random.normal(
            ks[7], (ctx_dim, embed_dim), jnp.float32)

        # one-time bf16 cast of the (big) frozen image-encoder weight
        self.w_img_bf16 = self.w_img.astype(jnp.bfloat16)

        # clip_model.logit_scale init: log(1/0.07)
        self.logit_scale = jnp.array([jnp.log(1.0 / 0.07)], jnp.float32)

        self._vmem_limit = _vmem_limit_bytes()

    # --- PromptLearner.forward (class_token_position == 'end'), kept for parity ---
    def _prompt_learner(self):
        d = self.ctx.shape[-1]
        ctx = jnp.broadcast_to(self.ctx[None], (self.n_cls, self.n_ctx, d))
        ctx_ood = jnp.broadcast_to(self.ctx_ood[None], (self.n_ex_prompts, self.n_ctx, d))
        prompts = jnp.concatenate([self.token_prefix, ctx, self.token_suffix], axis=1)
        ood_prompts = jnp.concatenate(
            [self.ood_token_prefix, ctx_ood, self.ood_token_suffix], axis=1)
        return jnp.concatenate([prompts, ood_prompts], axis=0)   # (n_cls + n_ex, L, D)

    # --- algebraically collapsed prompt assembly + mean-pool (never builds (N,L,D)) ---
    def _pooled_prompts(self):
        L = 1 + self.n_ctx + self.token_suffix.shape[1]
        ctx_sum = jnp.sum(self.ctx, axis=0)[None, :]
        ctx_ood_sum = jnp.sum(self.ctx_ood, axis=0)[None, :]
        pooled_id = (jnp.sum(self.token_prefix, axis=1) + ctx_sum
                     + jnp.sum(self.token_suffix, axis=1)) / L
        pooled_ood = (jnp.sum(self.ood_token_prefix, axis=1) + ctx_ood_sum
                      + jnp.sum(self.ood_token_suffix, axis=1)) / L
        return jnp.concatenate([pooled_id, pooled_ood], axis=0)  # (N, D) f32

    # --- hoisted text branch: normalized, scaled, transposed, zero-padded, bf16 ---
    def _text_features_scaled_t(self):
        pooled = self._pooled_prompts()                          # (N, D) f32
        txt = pooled @ self.w_text                               # (N, E) f32
        txt_n = txt / jnp.linalg.norm(txt, axis=-1, keepdims=True)
        scale = jnp.exp(self.logit_scale[0])
        txt_scaled_t = (scale * txt_n).T                         # (E, N) f32
        N = txt.shape[0]
        n_pad = _round_up(N, 128)                                # lane-dense logits
        # pad columns are *explicitly* zero -> padded logits are exactly zero
        txt_pad = jnp.zeros((txt_scaled_t.shape[0], n_pad), jnp.bfloat16)
        txt_pad = txt_pad.at[:, :N].set(txt_scaled_t.astype(jnp.bfloat16))
        return txt_pad, N

    def __call__(self, x, return_feat=False):
        B = x.shape[0]

        if return_feat:
            # not the hot path; plain f32 JAX for exact parity with the reference.
            pooled = self._pooled_prompts()
            img = x.reshape(B, -1).astype(jnp.float32) @ self.w_img
            txt = pooled @ self.w_text
            img_n = img / jnp.linalg.norm(img, axis=-1, keepdims=True)
            txt_n = txt / jnp.linalg.norm(txt, axis=-1, keepdims=True)
            return img_n, txt_n, jnp.exp(self.logit_scale[0])

        # --- fused Pallas hot path ---
        x_flat = x.reshape(B, -1)                                # f32, no cast pass
        txt_scaled_t, N = self._text_features_scaled_t()         # (E, n_pad) bf16
        E, n_pad = txt_scaled_t.shape
        F = x_flat.shape[1]

        tm, tk = _pick_tiles(B, F, E, n_pad, self._vmem_limit)
        logits_padded = fused_clip_forward(
            x_flat, self.w_img_bf16, txt_scaled_t, tm=tm, tk=tk,
            vmem_limit_bytes=self._vmem_limit)
        return logits_padded[:, :N]


if __name__ == "__main__":
    key = jax.random.PRNGKey(0)
    k_params, k_x = jax.random.split(key)

    n_cls, n_ex = 4, 4            # n_output = n_cls + n_ex_prompts = 8
    model = CoOpNegOODPromptPallas(
        k_params, n_cls=n_cls, n_ex_prompts=n_ex, n_ctx=4, ctx_dim=128,
        seq_len=16, embed_dim=128, image_shape=(4, 16, 16))

    x = jax.random.normal(k_x, (2, 4, 16, 16), jnp.float32)      # NCHW image batch

    logits = model(x)
    jax.block_until_ready(logits)
    assert logits.shape == (2, n_cls + n_ex), logits.shape
    assert bool(jnp.all(jnp.isfinite(logits)))

    # pure-JAX f32 reference: materialize prompts like PromptLearner.forward,
    # mean-pool, project, normalize, scaled cosine logits.
    prompts = model._prompt_learner()
    pooled_ref = jnp.mean(prompts, axis=1)
    txt = pooled_ref @ model.w_text
    img = x.reshape(2, -1) @ model.w_img
    img_n = img / jnp.linalg.norm(img, axis=-1, keepdims=True)
    txt_n = txt / jnp.linalg.norm(txt, axis=-1, keepdims=True)
    ref = jnp.exp(model.logit_scale[0]) * img_n @ txt_n.T
    max_err = float(jnp.max(jnp.abs(logits - ref)))
    assert max_err < 0.4, f"mismatch vs reference: {max_err}"

    print("KERNEL_OK")
</pallas_src>

<mosaic_0001>
module attributes {stable_mosaic.version = 11 : i64} {
  func.func @_fused_forward_kernel(%arg0: i32, %arg1: i32, %arg2: memref<2x1024xf32, #tpu.memory_space<vmem>>, %arg3: memref<1024x128xbf16, #tpu.memory_space<vmem>>, %arg4: memref<128x128xbf16, #tpu.memory_space<vmem>>, %arg5: memref<2x128xf32, #tpu.memory_space<vmem>>, %arg6: memref<2x128xf32, #tpu.memory_space<vmem>>) attributes {dimension_semantics = [#tpu.dimension_semantics<parallel>, #tpu.dimension_semantics<arbitrary>], iteration_bounds = array<i64: 1, 1>, scalar_prefetch = 0 : i64, scratch_operands = 1 : i64, tpu.core_type = #tpu.core_type<tc>, window_params = [{transform_indices = @transform_0, window_bounds = array<i64: 2, 1024>}, {transform_indices = @transform_1, window_bounds = array<i64: 1024, 128>}, {pipeline_mode = #tpu.pipeline_mode<synchronous>, transform_indices = @transform_2, window_bounds = array<i64: 128, 128>}, {transform_indices = @transform_3, window_bounds = array<i64: 2, 128>}]} {
    %c0_i32 = arith.constant 0 : i32
    %0 = arith.cmpi eq, %arg1, %c0_i32 : i32
    %1 = arith.extui %0 : i1 to i32
    %c0_i32_0 = arith.constant 0 : i32
    %2 = arith.cmpi ne, %1, %c0_i32_0 : i32
    scf.if %2 {
      %cst_10 = arith.constant 0.000000e+00 : f32
      %13 = vector.broadcast %cst_10 : f32 to vector<2x128xf32>
      %c0_11 = arith.constant 0 : index
      %c0_12 = arith.constant 0 : index
      %14 = vector.load %arg6[%c0_11, %c0_12] : memref<2x128xf32, #tpu.memory_space<vmem>>, vector<2x128xf32>
      tpu.vector_store %arg6[%c0_11, %c0_12], %13 {strides = array<i32>} : memref<2x128xf32, #tpu.memory_space<vmem>>, vector<2x128xf32>,
    } else {
    }
    %c0 = arith.constant 0 : index
    %c0_1 = arith.constant 0 : index
    %3 = vector.load %arg6[%c0, %c0_1] : memref<2x128xf32, #tpu.memory_space<vmem>>, vector<2x128xf32>
    %c0_2 = arith.constant 0 : index
    %c0_3 = arith.constant 0 : index
    %4 = vector.load %arg2[%c0_2, %c0_3] : memref<2x1024xf32, #tpu.memory_space<vmem>>, vector<2x1024xf32>
    %5 = arith.truncf %4 : vector<2x1024xf32> to vector<2x1024xbf16>
    %c0_4 = arith.constant 0 : index
    %c0_5 = arith.constant 0 : index
    %6 = vector.load %arg3[%c0_4, %c0_5] : memref<1024x128xbf16, #tpu.memory_space<vmem>>, vector<1024x128xbf16>
    %cst = arith.constant dense<0.000000e+00> : vector<2x128xf32>
    %7 = tpu.matmul %5, %6, %cst {dimension_numbers = #tpu.dot_dimension_numbers<[1], [0], [0], [1], [0, 0, 1, 1], [], []>} : vector<2x1024xbf16>, vector<1024x128xbf16>, vector<2x128xf32> -> vector<2x128xf32>
    %8 = arith.addf %3, %7 : vector<2x128xf32>
    %c0_6 = arith.constant 0 : index
    %c0_7 = arith.constant 0 : index
    %9 = vector.load %arg6[%c0_6, %c0_7] : memref<2x128xf32, #tpu.memory_space<vmem>>, vector<2x128xf32>
    tpu.vector_store %arg6[%c0_6, %c0_7], %8 {strides = array<i32>} : memref<2x128xf32, #tpu.memory_space<vmem>>, vector<2x128xf32>,
    %c0_i32_8 = arith.constant 0 : i32
    %10 = arith.cmpi eq, %arg1, %c0_i32_8 : i32
    %11 = arith.extui %10 : i1 to i32
    %c0_i32_9 = arith.constant 0 : i32
    %12 = arith.cmpi ne, %11, %c0_i32_9 : i32
    scf.if %12 {
      %c0_10 = arith.constant 0 : index
      %c0_11 = arith.constant 0 : index
      %13 = vector.load %arg6[%c0_10, %c0_11] : memref<2x128xf32, #tpu.memory_space<vmem>>, vector<2x128xf32>
      %14 = arith.mulf %13, %13 : vector<2x128xf32>
      %cst_12 = arith.constant dense<0.000000e+00> : vector<2xf32>
      %15 = vector.multi_reduction <add>, %14, %cst_12 [1] : vector<2x128xf32> to vector<2xf32>
      %16 = vector.shape_cast %15 : vector<2xf32> to vector<2x1xf32>
      %cst_13 = arith.constant 9.99999996E-13 : f32
      %17 = vector.broadcast %cst_13 : f32 to vector<2x1xf32>
      %18 = arith.addf %16, %17 : vector<2x1xf32>
      %19 = math.rsqrt %18 : vector<2x1xf32>
      %20 = vector.broadcast %19 : vector<2x1xf32> to vector<2x128xf32>
      %21 = arith.mulf %13, %20 : vector<2x128xf32>
      %22 = arith.truncf %21 : vector<2x128xf32> to vector<2x128xbf16>
      %c0_14 = arith.constant 0 : index
      %c0_15 = arith.constant 0 : index
      %23 = vector.load %arg4[%c0_14, %c0_15] : memref<128x128xbf16, #tpu.memory_space<vmem>>, vector<128x128xbf16>
      %cst_16 = arith.constant dense<0.000000e+00> : vector<2x128xf32>
      %24 = tpu.matmul %22, %23, %cst_16 {dimension_numbers = #tpu.dot_dimension_numbers<[1], [0], [0], [1], [0, 0, 1, 1], [], []>} : vector<2x128xbf16>, vector<128x128xbf16>, vector<2x128xf32> -> vector<2x128xf32>
      %c0_17 = arith.constant 0 : index
      %c0_18 = arith.constant 0 : index
      %25 = vector.load %arg5[%c0_17, %c0_18] : memref<2x128xf32, #tpu.memory_space<vmem>>, vector<2x128xf32>
      tpu.vector_store %arg5[%c0_17, %c0_18], %24 {strides = array<i32>} : memref<2x128xf32, #tpu.memory_space<vmem>>, vector<2x128xf32>,
    } else {
    }
    return
  }
  func.func @transform_0(%arg0: i32, %arg1: i32) -> (i32, i32) {
    %c0_i32 = arith.constant 0 : i32
    return %arg0, %arg1 : i32, i32
  }
  func.func @transform_1(%arg0: i32, %arg1: i32) -> (i32, i32) {
    %c0_i32 = arith.constant 0 : i32
    %c0_i32_0 = arith.constant 0 : i32
    return %arg1, %c0_i32 : i32, i32
  }
  func.func @transform_2(%arg0: i32, %arg1: i32) -> (i32, i32) {
    %c0_i32 = arith.constant 0 : i32
    %c0_i32_0 = arith.constant 0 : i32
    %c0_i32_1 = arith.constant 0 : i32
    return %c0_i32, %c0_i32_0 : i32, i32
  }
  func.func @transform_3(%arg0: i32, %arg1: i32) -> (i32, i32) {
    %c0_i32 = arith.constant 0 : i32
    %c0_i32_0 = arith.constant 0 : i32
    return %arg0, %c0_i32 : i32, i32
  }
}

</mosaic_0001>

<llo_original>
// kernel: tpu_custom_call.1
$region0: #{tpu_custom_call.1}
  #allocation0 [shape = 'u32[]', space=smem, size = 0x4, offset = 0x4, fixed_abs, tag = 'smem constant byte address 0x4 - core index']
  #allocation1 [shape = 'u32[144,128]{1,0:T(1,128)}', space=vmem, size = 0x12000, scoped, tag = 'internal scratch']
  #allocation2 [shape = 'f32[2,128]{1,0:T(2,128)}', space=vmem, size = 0x400, scoped, tag = 'scratch operand']
  %s0 = inlined_call_operand.hbm [shape: f32[2,1024], index: 0, kind: input, shape index: {}]
  %s1 = inlined_call_operand.hbm [shape: bf16[1024,128], index: 1, kind: input, shape index: {}]
  %s2 = inlined_call_operand.hbm [shape: bf16[128,128], index: 2, kind: input, shape index: {}]
  %s3 = inlined_call_operand.hbm [shape: f32[2,128], index: 3, kind: output, shape index: {}]
  %s4 = sld [smem:[#allocation0]]
  $region42: #{tpu_custom_call.1} parent=0
    _
  %s6 = ssub.s32 1, %s4
  %s7 = scalar_select 0, %s6, %s4
  $region1: #{tpu_custom_call.1} parent=0
    #allocation3 [shape = 'u8[8192]{0}', space=vmem, size = 0x2000, scoped, tag = 'input window, operand 0, single buffered']
    #allocation4 [shape = 's32[1]{0}', space=sflag, size = 0x4, scoped, tag = 'scoped memory for tpu_custom_call.1']
    #allocation5 [shape = 's32[1]{0}', space=sflag, size = 0x4, scoped, tag = 'scoped memory for tpu_custom_call.1']
    #allocation6 [shape = 'u8[262144]{0}', space=vmem, size = 0x40000, scoped, tag = 'input window, operand 1, single buffered']
    #allocation7 [shape = 's32[1]{0}', space=sflag, size = 0x4, scoped, tag = 'scoped memory for tpu_custom_call.1']
    #allocation8 [shape = 'u8[32768]{0}', space=vmem, size = 0x8000, scoped, tag = 'input window, operand 2, single buffered']
    #allocation9 [shape = 'u8[1024]{0}', space=vmem, size = 0x400, scoped, tag = 'output window, operand 0, single buffered']
    %8 = vsyncpa [#allocation4], 0
    %9 = vsyncpa [#allocation7], 0
    %10 = vsyncpa [#allocation5], 0
    // Predicated region
    $region2: #{tpu_custom_call.1} parent=1 // pred_check
      _
    $region3: #{tpu_custom_call.1} parent=1 // pred_check_branch
      %12 = sbr.rel (0) target = $region5
    $region4: #{tpu_custom_call.1} parent=1 // pred_region
      %s14 = ssub.s32 256, 256
      %15 = vsyncadd [#allocation4], %s14
      %s17 = sshll.u32 [#allocation3], 4
      %s18 = int_to_ptr.vmem [resolvable:$true] %s17
      %20 = dma.hbm_to_vmem [thread:$0]  %s0, 256, %s18, [#allocation4]
    $region5: #{tpu_custom_call.1} parent=1 // pred_fallthru
      _
    // Predicated region
    $region6: #{tpu_custom_call.1} parent=1 // pred_check
      _
    $region7: #{tpu_custom_call.1} parent=1 // pred_check_branch
      %22 = sbr.rel (0) target = $region9
    $region8: #{tpu_custom_call.1} parent=1 // pred_region
      %s24 = ssub.s32 8192, 8192
      %25 = vsyncadd [#allocation7], %s24
      %s26 = sshll.u32 [#allocation6], 4
      %s27 = int_to_ptr.vmem [resolvable:$true] %s26
      %32 = dma.hbm_to_vmem [thread:$0]  %s1, 8192, %s27, [#allocation7], 64, 64, 4
    $region9: #{tpu_custom_call.1} parent=1 // pred_fallthru
      _
    // Predicated region
    $region10: #{tpu_custom_call.1} parent=1 // pred_check
      _
    $region11: #{tpu_custom_call.1} parent=1 // pred_check_branch
      %34 = sbr.rel (0) target = $region13
    $region12: #{tpu_custom_call.1} parent=1 // pred_region
      %s36 = ssub.s32 1024, 1024
      %37 = vsyncadd [#allocation7], %s36
      %s38 = sshll.u32 [#allocation8], 4
      %s39 = int_to_ptr.vmem [resolvable:$true] %s38
      %44 = dma.hbm_to_vmem [thread:$0]  %s2, 1024, %s39, [#allocation7], 64, 64, 4
    $region13: #{tpu_custom_call.1} parent=1 // pred_fallthru
      _
    // Predicated region
    $region14: #{tpu_custom_call.1} parent=1 // pred_check
      _
    $region15: #{tpu_custom_call.1} parent=1 // pred_check_branch
      %46 = sbr.rel (0) target = $region17
    $region16: #{tpu_custom_call.1} parent=1 // pred_region
      %47 = dma.done [#allocation4], 256
    $region17: #{tpu_custom_call.1} parent=1 // pred_fallthru
      _
    // Predicated region
    $region18: #{tpu_custom_call.1} parent=1 // pred_check
      _
    $region19: #{tpu_custom_call.1} parent=1 // pred_check_branch
      %49 = sbr.rel (0) target = $region21
    $region20: #{tpu_custom_call.1} parent=1 // pred_region
      %50 = dma.done [#allocation7], 8192
    $region21: #{tpu_custom_call.1} parent=1 // pred_fallthru
      _
    // Predicated region
    $region22: #{tpu_custom_call.1} parent=1 // pred_check
      _
    $region23: #{tpu_custom_call.1} parent=1 // pred_check_branch
      %52 = sbr.rel (0) target = $region25
    $region24: #{tpu_custom_call.1} parent=1 // pred_region
      %53 = dma.done [#allocation7], 1024
    $region25: #{tpu_custom_call.1} parent=1 // pred_fallthru
      _
    %p55 = scmp.eq.s32.totalorder 0, 0
    // Predicated region
    $region26: #{tpu_custom_call.1} parent=1 // pred_check
      %p56 = pneg %p55
    $region27: #{tpu_custom_call.1} parent=1 // pred_check_branch
      %58 = sbr.rel (%p56) target = $region29
    $region28: #{tpu_custom_call.1} parent=1 // pred_region
      %59 = vst [vmem:[#allocation2] sm:$0x3] 0.0
    $region29: #{tpu_custom_call.1} parent=1 // pred_fallthru
      _
    %v60 = vld [vmem:[#allocation2] sm:$0x3]
    %v61 = vld [vmem:[#allocation3] sm:$0xff]
    %v62 = vld [vmem:[#allocation3 + $0x8] sm:$0xff]
    %v65 = vcombine.high %v61, %v61
    %v67 = vunpack.c.l.s4 1983009808
    %v68 = vunpack.c.0.s8 %v67
    %v69 = vlaneseq
    %v70 = vshrl.u32 %v69, 7
    %v71 = vsub.s32 %v68, %v70
    %v72 = vrot.slane %v61, %v71
    %v74 = vunpack.c.l.s4 1983009808
    %v75 = vunpack.c.0.s8 %v74
    %v76 = vlaneseq
    %v77 = vshrl.u32 %v76, 7
    %v78 = vsub.s32 %v75, %v77
    %v79 = vrot.slane %v65, %v78
    %v80 = vcombine.high %v72, %v72
    %v81 = vcombine.high %v79, %v79
    %v82 = vcombine.high %v62, %v62
    %v84 = vunpack.c.l.s4 1983009808
    %v85 = vunpack.c.0.s8 %v84
    %v86 = vlaneseq
    %v87 = vshrl.u32 %v86, 7
    %v88 = vsub.s32 %v85, %v87
    %v89 = vrot.slane %v62, %v88
    %v91 = vunpack.c.l.s4 1983009808
    %v92 = vunpack.c.0.s8 %v91
    %v93 = vlaneseq
    %v94 = vshrl.u32 %v93, 7
    %v95 = vsub.s32 %v92, %v94
    %v96 = vrot.slane %v82, %v95
    %v97 = vcombine.high %v89, %v89
    %v98 = vcombine.high %v96, %v96
    %v107 = vpack.c.bf16 %v72, %v72
    %v108 = vpack.c.bf16 %v80, %v80
    %v109 = vpack.c.bf16 %v79, %v79
    %v110 = vpack.c.bf16 %v81, %v81
    %v111 = vpack.c.bf16 %v89, %v89
    %v112 = vpack.c.bf16 %v97, %v97
    %v113 = vpack.c.bf16 %v96, %v96
    %v114 = vpack.c.bf16 %v98, %v98
    %v115 = vld [vmem:[#allocation6] sm:$0xf]
    %v116 = vld [vmem:[#allocation6 + $0x4] sm:$0xf]
    %v117 = vld [vmem:[#allocation6 + $0x8] sm:$0xf]
    %v118 = vld [vmem:[#allocation6 + $0xc] sm:$0xf]
    %v119 = vld [vmem:[#allocation6 + $0x10] sm:$0xf]
    %v120 = vld [vmem:[#allocation6 + $0x14] sm:$0xf]
    %v121 = vld [vmem:[#allocation6 + $0x18] sm:$0xf]
    %v122 = vld [vmem:[#allocation6 + $0x1c] sm:$0xf]
    %v123 = vld [vmem:[#allocation6 + $0x20] sm:$0xf]
    %v124 = vld [vmem:[#allocation6 + $0x24] sm:$0xf]
    %v125 = vld [vmem:[#allocation6 + $0x28] sm:$0xf]
    %v126 = vld [vmem:[#allocation6 + $0x2c] sm:$0xf]
    %v127 = vld [vmem:[#allocation6 + $0x30] sm:$0xf]
    %v128 = vld [vmem:[#allocation6 + $0x34] sm:$0xf]
    %v129 = vld [vmem:[#allocation6 + $0x38] sm:$0xf]
    %v130 = vld [vmem:[#allocation6 + $0x3c] sm:$0xf]
    %v131 = vld [vmem:[#allocation6 + $0x40] sm:$0xf]
    %v132 = vld [vmem:[#allocation6 + $0x44] sm:$0xf]
    %v133 = vld [vmem:[#allocation6 + $0x48] sm:$0xf]
    %v134 = vld [vmem:[#allocation6 + $0x4c] sm:$0xf]
    %v135 = vld [vmem:[#allocation6 + $0x50] sm:$0xf]
    %v136 = vld [vmem:[#allocation6 + $0x54] sm:$0xf]
    %v137 = vld [vmem:[#allocation6 + $0x58] sm:$0xf]
    %v138 = vld [vmem:[#allocation6 + $0x5c] sm:$0xf]
    %v139 = vld [vmem:[#allocation6 + $0x60] sm:$0xf]
    %v140 = vld [vmem:[#allocation6 + $0x64] sm:$0xf]
    %v141 = vld [vmem:[#allocation6 + $0x68] sm:$0xf]
    %v142 = vld [vmem:[#allocation6 + $0x6c] sm:$0xf]
    %v143 = vld [vmem:[#allocation6 + $0x70] sm:$0xf]
    %v144 = vld [vmem:[#allocation6 + $0x74] sm:$0xf]
    %v145 = vld [vmem:[#allocation6 + $0x78] sm:$0xf]
    %v146 = vld [vmem:[#allocation6 + $0x7c] sm:$0xf]
    %v147 = vld [vmem:[#allocation6 + $0x80] sm:$0xf]
    %v148 = vld [vmem:[#allocation6 + $0x84] sm:$0xf]
    %v149 = vld [vmem:[#allocation6 + $0x88] sm:$0xf]
    %v150 = vld [vmem:[#allocation6 + $0x8c] sm:$0xf]
    %v151 = vld [vmem:[#allocation6 + $0x90] sm:$0xf]
    %v152 = vld [vmem:[#allocation6 + $0x94] sm:$0xf]
    %v153 = vld [vmem:[#allocation6 + $0x98] sm:$0xf]
    %v154 = vld [vmem:[#allocation6 + $0x9c] sm:$0xf]
    %v155 = vld [vmem:[#allocation6 + $0xa0] sm:$0xf]
    %v156 = vld [vmem:[#allocation6 + $0xa4] sm:$0xf]
    %v157 = vld [vmem:[#allocation6 + $0xa8] sm:$0xf]
    %v158 = vld [vmem:[#allocation6 + $0xac] sm:$0xf]
    %v159 = vld [vmem:[#allocation6 + $0xb0] sm:$0xf]
    %v160 = vld [vmem:[#allocation6 + $0xb4] sm:$0xf]
    %v161 = vld [vmem:[#allocation6 + $0xb8] sm:$0xf]
    %v162 = vld [vmem:[#allocation6 + $0xbc] sm:$0xf]
    %v163 = vld [vmem:[#allocation6 + $0xc0] sm:$0xf]
    %v164 = vld [vmem:[#allocation6 + $0xc4] sm:$0xf]
    %v165 = vld [vmem:[#allocation6 + $0xc8] sm:$0xf]
    %v166 = vld [vmem:[#allocation6 + $0xcc] sm:$0xf]
    %v167 = vld [vmem:[#allocation6 + $0xd0] sm:$0xf]
    %v168 = vld [vmem:[#allocation6 + $0xd4] sm:$0xf]
    %v169 = vld [vmem:[#allocation6 + $0xd8] sm:$0xf]
    %v170 = vld [vmem:[#allocation6 + $0xdc] sm:$0xf]
    %v171 = vld [vmem:[#allocation6 + $0xe0] sm:$0xf]
    %v172 = vld [vmem:[#allocation6 + $0xe4] sm:$0xf]
    %v173 = vld [vmem:[#allocation6 + $0xe8] sm:$0xf]
    %v174 = vld [vmem:[#allocation6 + $0xec] sm:$0xf]
    %v175 = vld [vmem:[#allocation6 + $0xf0] sm:$0xf]
    %v176 = vld [vmem:[#allocation6 + $0xf4] sm:$0xf]
    %v177 = vld [vmem:[#allocation6 + $0xf8] sm:$0xf]
    %v178 = vld [vmem:[#allocation6 + $0xfc] sm:$0xf]
    %v179 = vld [vmem:[#allocation6 + $0x100] sm:$0xf]
    %v180 = vld [vmem:[#allocation6 + $0x104] sm:$0xf]
    %v181 = vld [vmem:[#allocation6 + $0x108] sm:$0xf]
    %v182 = vld [vmem:[#allocation6 + $0x10c] sm:$0xf]
    %v183 = vld [vmem:[#allocation6 + $0x110] sm:$0xf]
    %v184 = vld [vmem:[#allocation6 + $0x114] sm:$0xf]
    %v185 = vld [vmem:[#allocation6 + $0x118] sm:$0xf]
    %v186 = vld [vmem:[#allocation6 + $0x11c] sm:$0xf]
    %v187 = vld [vmem:[#allocation6 + $0x120] sm:$0xf]
    %v188 = vld [vmem:[#allocation6 + $0x124] sm:$0xf]
    %v189 = vld [vmem:[#allocation6 + $0x128] sm:$0xf]
    %v190 = vld [vmem:[#allocation6 + $0x12c] sm:$0xf]
    %v191 = vld [vmem:[#allocation6 + $0x130] sm:$0xf]
    %v192 = vld [vmem:[#allocation6 + $0x134] sm:$0xf]
    %v193 = vld [vmem:[#allocation6 + $0x138] sm:$0xf]
    %v194 = vld [vmem:[#allocation6 + $0x13c] sm:$0xf]
    %v195 = vld [vmem:[#allocation6 + $0x140] sm:$0xf]
    %v196 = vld [vmem:[#allocation6 + $0x144] sm:$0xf]
    %v197 = vld [vmem:[#allocation6 + $0x148] sm:$0xf]
    %v198 = vld [vmem:[#allocation6 + $0x14c] sm:$0xf]
    %v199 = vld [vmem:[#allocation6 + $0x150] sm:$0xf]
    %v200 = vld [vmem:[#allocation6 + $0x154] sm:$0xf]
    %v201 = vld [vmem:[#allocation6 + $0x158] sm:$0xf]
    %v202 = vld [vmem:[#allocation6 + $0x15c] sm:$0xf]
    %v203 = vld [vmem:[#allocation6 + $0x160] sm:$0xf]
    %v204 = vld [vmem:[#allocation6 + $0x164] sm:$0xf]
    %v205 = vld [vmem:[#allocation6 + $0x168] sm:$0xf]
    %v206 = vld [vmem:[#allocation6 + $0x16c] sm:$0xf]
    %v207 = vld [vmem:[#allocation6 + $0x170] sm:$0xf]
    %v208 = vld [vmem:[#allocation6 + $0x174] sm:$0xf]
    %v209 = vld [vmem:[#allocation6 + $0x178] sm:$0xf]
    %v210 = vld [vmem:[#allocation6 + $0x17c] sm:$0xf]
    %v211 = vld [vmem:[#allocation6 + $0x180] sm:$0xf]
    %v212 = vld [vmem:[#allocation6 + $0x184] sm:$0xf]
    %v213 = vld [vmem:[#allocation6 + $0x188] sm:$0xf]
    %v214 = vld [vmem:[#allocation6 + $0x18c] sm:$0xf]
    %v215 = vld [vmem:[#allocation6 + $0x190] sm:$0xf]
    %v216 = vld [vmem:[#allocation6 + $0x194] sm:$0xf]
    %v217 = vld [vmem:[#allocation6 + $0x198] sm:$0xf]
    %v218 = vld [vmem:[#allocation6 + $0x19c] sm:$0xf]
    %v219 = vld [vmem:[#allocation6 + $0x1a0] sm:$0xf]
    %v220 = vld [vmem:[#allocation6 + $0x1a4] sm:$0xf]
    %v221 = vld [vmem:[#allocation6 + $0x1a8] sm:$0xf]
    %v222 = vld [vmem:[#allocation6 + $0x1ac] sm:$0xf]
    %v223 = vld [vmem:[#allocation6 + $0x1b0] sm:$0xf]
    %v224 = vld [vmem:[#allocation6 + $0x1b4] sm:$0xf]
    %v225 = vld [vmem:[#allocation6 + $0x1b8] sm:$0xf]
    %v226 = vld [vmem:[#allocation6 + $0x1bc] sm:$0xf]
    %v227 = vld [vmem:[#allocation6 + $0x1c0] sm:$0xf]
    %v228 = vld [vmem:[#allocation6 + $0x1c4] sm:$0xf]
    %v229 = vld [vmem:[#allocation6 + $0x1c8] sm:$0xf]
    %v230 = vld [vmem:[#allocation6 + $0x1cc] sm:$0xf]
    %v231 = vld [vmem:[#allocation6 + $0x1d0] sm:$0xf]
    %v232 = vld [vmem:[#allocation6 + $0x1d4] sm:$0xf]
    %v233 = vld [vmem:[#allocation6 + $0x1d8] sm:$0xf]
    %v234 = vld [vmem:[#allocation6 + $0x1dc] sm:$0xf]
    %v235 = vld [vmem:[#allocation6 + $0x1e0] sm:$0xf]
    %v236 = vld [vmem:[#allocation6 + $0x1e4] sm:$0xf]
    %v237 = vld [vmem:[#allocation6 + $0x1e8] sm:$0xf]
    %v238 = vld [vmem:[#allocation6 + $0x1ec] sm:$0xf]
    %v239 = vld [vmem:[#allocation6 + $0x1f0] sm:$0xf]
    %v240 = vld [vmem:[#allocation6 + $0x1f4] sm:$0xf]
    %v241 = vld [vmem:[#allocation6 + $0x1f8] sm:$0xf]
    %v242 = vld [vmem:[#allocation6 + $0x1fc] sm:$0xf]
    %v371 = vunpack.c.l.b16 %v115
    %v372 = vunpack.c.l.b16 %v116
    %v373 = vunpack.c.l.b16 %v117
    %v374 = vunpack.c.l.b16 %v118
    %v375 = vunpack.c.l.b16 %v119
    %v376 = vunpack.c.l.b16 %v120
    %v377 = vunpack.c.l.b16 %v121
    %v378 = vunpack.c.l.b16 %v122
    %v379 = vunpack.c.l.b16 %v123
    %v380 = vunpack.c.l.b16 %v124
    %v381 = vunpack.c.l.b16 %v125
    %v382 = vunpack.c.l.b16 %v126
    %v383 = vunpack.c.l.b16 %v127
    %v384 = vunpack.c.l.b16 %v128
    %v385 = vunpack.c.l.b16 %v129
    %v386 = vunpack.c.l.b16 %v130
    %v387 = vunpack.c.l.b16 %v131
    %v388 = vunpack.c.l.b16 %v132
    %v389 = vunpack.c.l.b16 %v133
    %v390 = vunpack.c.l.b16 %v134
    %v391 = vunpack.c.l.b16 %v135
    %v392 = vunpack.c.l.b16 %v136
    %v393 = vunpack.c.l.b16 %v137
    %v394 = vunpack.c.l.b16 %v138
    %v395 = vunpack.c.l.b16 %v139
    %v396 = vunpack.c.l.b16 %v140
    %v397 = vunpack.c.l.b16 %v141
    %v398 = vunpack.c.l.b16 %v142
    %v399 = vunpack.c.l.b16 %v143
    %v400 = vunpack.c.l.b16 %v144
    %v401 = vunpack.c.l.b16 %v145
    %v402 = vunpack.c.l.b16 %v146
    %v403 = vunpack.c.l.b16 %v147
    %v404 = vunpack.c.l.b16 %v148
    %v405 = vunpack.c.l.b16 %v149
    %v406 = vunpack.c.l.b16 %v150
    %v407 = vunpack.c.l.b16 %v151
    %v408 = vunpack.c.l.b16 %v152
    %v409 = vunpack.c.l.b16 %v153
    %v410 = vunpack.c.l.b16 %v154
    %v411 = vunpack.c.l.b16 %v155
    %v412 = vunpack.c.l.b16 %v156
    %v413 = vunpack.c.l.b16 %v157
    %v414 = vunpack.c.l.b16 %v158
    %v415 = vunpack.c.l.b16 %v159
    %v416 = vunpack.c.l.b16 %v160
    %v417 = vunpack.c.l.b16 %v161
    %v418 = vunpack.c.l.b16 %v162
    %v419 = vunpack.c.l.b16 %v163
    %v420 = vunpack.c.l.b16 %v164
    %v421 = vunpack.c.l.b16 %v165
    %v422 = vunpack.c.l.b16 %v166
    %v423 = vunpack.c.l.b16 %v167
    %v424 = vunpack.c.l.b16 %v168
    %v425 = vunpack.c.l.b16 %v169
    %v426 = vunpack.c.l.b16 %v170
    %v427 = vunpack.c.l.b16 %v171
    %v428 = vunpack.c.l.b16 %v172
    %v429 = vunpack.c.l.b16 %v173
    %v430 = vunpack.c.l.b16 %v174
    %v431 = vunpack.c.l.b16 %v175
    %v432 = vunpack.c.l.b16 %v176
    %v433 = vunpack.c.l.b16 %v177
    %v434 = vunpack.c.l.b16 %v178
    %v435 = vunpack.c.l.b16 %v179
    %v436 = vunpack.c.l.b16 %v180
    %v437 = vunpack.c.l.b16 %v181
    %v438 = vunpack.c.l.b16 %v182
    %v439 = vunpack.c.l.b16 %v183
    %v440 = vunpack.c.l.b16 %v184
    %v441 = vunpack.c.l.b16 %v185
    %v442 = vunpack.c.l.b16 %v186
    %v443 = vunpack.c.l.b16 %v187
    %v444 = vunpack.c.l.b16 %v188
    %v445 = vunpack.c.l.b16 %v189
    %v446 = vunpack.c.l.b16 %v190
    %v447 = vunpack.c.l.b16 %v191
    %v448 = vunpack.c.l.b16 %v192
    %v449 = vunpack.c.l.b16 %v193
    %v450 = vunpack.c.l.b16 %v194
    %v451 = vunpack.c.l.b16 %v195
    %v452 = vunpack.c.l.b16 %v196
    %v453 = vunpack.c.l.b16 %v197
    %v454 = vunpack.c.l.b16 %v198
    %v455 = vunpack.c.l.b16 %v199
    %v456 = vunpack.c.l.b16 %v200
    %v457 = vunpack.c.l.b16 %v201
    %v458 = vunpack.c.l.b16 %v202
    %v459 = vunpack.c.l.b16 %v203
    %v460 = vunpack.c.l.b16 %v204
    %v461 = vunpack.c.l.b16 %v205
    %v462 = vunpack.c.l.b16 %v206
    %v463 = vunpack.c.l.b16 %v207
    %v464 = vunpack.c.l.b16 %v208
    %v465 = vunpack.c.l.b16 %v209
    %v466 = vunpack.c.l.b16 %v210
    %v467 = vunpack.c.l.b16 %v211
    %v468 = vunpack.c.l.b16 %v212
    %v469 = vunpack.c.l.b16 %v213
    %v470 = vunpack.c.l.b16 %v214
    %v471 = vunpack.c.l.b16 %v215
    %v472 = vunpack.c.l.b16 %v216
    %v473 = vunpack.c.l.b16 %v217
    %v474 = vunpack.c.l.b16 %v218
    %v475 = vunpack.c.l.b16 %v219
    %v476 = vunpack.c.l.b16 %v220
    %v477 = vunpack.c.l.b16 %v221
    %v478 = vunpack.c.l.b16 %v222
    %v479 = vunpack.c.l.b16 %v223
    %v480 = vunpack.c.l.b16 %v224
    %v481 = vunpack.c.l.b16 %v225
    %v482 = vunpack.c.l.b16 %v226
    %v483 = vunpack.c.l.b16 %v227
    %v484 = vunpack.c.l.b16 %v228
    %v485 = vunpack.c.l.b16 %v229
    %v486 = vunpack.c.l.b16 %v230
    %v487 = vunpack.c.l.b16 %v231
    %v488 = vunpack.c.l.b16 %v232
    %v489 = vunpack.c.l.b16 %v233
    %v490 = vunpack.c.l.b16 %v234
    %v491 = vunpack.c.l.b16 %v235
    %v492 = vunpack.c.l.b16 %v236
    %v493 = vunpack.c.l.b16 %v237
    %v494 = vunpack.c.l.b16 %v238
    %v495 = vunpack.c.l.b16 %v239
    %v496 = vunpack.c.l.b16 %v240
    %v497 = vunpack.c.l.b16 %v241
    %v498 = vunpack.c.l.b16 %v242
    %v499 = vpack.c.b16 %v372, %v371
    %v500 = vpack.c.b16 %v374, %v373
    %v501 = vpack.c.b16 %v376, %v375
    %v502 = vpack.c.b16 %v378, %v377
    %v503 = vpack.c.b16 %v380, %v379
    %v504 = vpack.c.b16 %v382, %v381
    %v505 = vpack.c.b16 %v384, %v383
    %v506 = vpack.c.b16 %v386, %v385
    %v507 = vpack.c.b16 %v388, %v387
    %v508 = vpack.c.b16 %v390, %v389
    %v509 = vpack.c.b16 %v392, %v391
    %v510 = vpack.c.b16 %v394, %v393
    %v511 = vpack.c.b16 %v396, %v395
    %v512 = vpack.c.b16 %v398, %v397
    %v513 = vpack.c.b16 %v400, %v399
    %v514 = vpack.c.b16 %v402, %v401
    %v515 = vpack.c.b16 %v404, %v403
    %v516 = vpack.c.b16 %v406, %v405
    %v517 = vpack.c.b16 %v408, %v407
    %v518 = vpack.c.b16 %v410, %v409
    %v519 = vpack.c.b16 %v412, %v411
    %v520 = vpack.c.b16 %v414, %v413
    %v521 = vpack.c.b16 %v416, %v415
    %v522 = vpack.c.b16 %v418, %v417
    %v523 = vpack.c.b16 %v420, %v419
    %v524 = vpack.c.b16 %v422, %v421
    %v525 = vpack.c.b16 %v424, %v423
    %v526 = vpack.c.b16 %v426, %v425
    %v527 = vpack.c.b16 %v428, %v427
    %v528 = vpack.c.b16 %v430, %v429
    %v529 = vpack.c.b16 %v432, %v431
    %v530 = vpack.c.b16 %v434, %v433
    %v531 = vpack.c.b16 %v436, %v435
    %v532 = vpack.c.b16 %v438, %v437
    %v533 = vpack.c.b16 %v440, %v439
    %v534 = vpack.c.b16 %v442, %v441
    %v535 = vpack.c.b16 %v444, %v443
    %v536 = vpack.c.b16 %v446, %v445
    %v537 = vpack.c.b16 %v448, %v447
    %v538 = vpack.c.b16 %v450, %v449
    %v539 = vpack.c.b16 %v452, %v451
    %v540 = vpack.c.b16 %v454, %v453
    %v541 = vpack.c.b16 %v456, %v455
    %v542 = vpack.c.b16 %v458, %v457
    %v543 = vpack.c.b16 %v460, %v459
    %v544 = vpack.c.b16 %v462, %v461
    %v545 = vpack.c.b16 %v464, %v463
    %v546 = vpack.c.b16 %v466, %v465
    %v547 = vpack.c.b16 %v468, %v467
    %v548 = vpack.c.b16 %v470, %v469
    %v549 = vpack.c.b16 %v472, %v471
    %v550 = vpack.c.b16 %v474, %v473
    %v551 = vpack.c.b16 %v476, %v475
    %v552 = vpack.c.b16 %v478, %v477
    %v553 = vpack.c.b16 %v480, %v479
    %v554 = vpack.c.b16 %v482, %v481
    %v555 = vpack.c.b16 %v484, %v483
    %v556 = vpack.c.b16 %v486, %v485
    %v557 = vpack.c.b16 %v488, %v487
    %v558 = vpack.c.b16 %v490, %v489
    %v559 = vpack.c.b16 %v492, %v491
    %v560 = vpack.c.b16 %v494, %v493
    %v561 = vpack.c.b16 %v496, %v495
    %v562 = vpack.c.b16 %v498, %v497
    %627 = vmatprep.subr.bf16.mxu0 0
    %628 = vmatpush1.bf16.msra.mxu0 %v506
    %629 = vmatprep.subr.bf16.mxu0 0
    %630 = vmatpush1.bf16.msra.mxu0 %v505
    %631 = vmatprep.subr.bf16.mxu0 0
    %632 = vmatpush1.bf16.msra.mxu0 %v504
    %633 = vmatprep.subr.bf16.mxu0 0
    %634 = vmatpush1.bf16.msra.mxu0 %v503
    %635 = vmatprep.subr.bf16.mxu0 0
    %636 = vmatpush1.bf16.msra.mxu0 %v502
    %637 = vmatprep.subr.bf16.mxu0 0
    %638 = vmatpush1.bf16.msra.mxu0 %v501
    %639 = vmatprep.subr.bf16.mxu0 0
    %640 = vmatpush1.bf16.msra.mxu0 %v500
    %641 = vmatprep.subr.bf16.mxu0 0
    %642 = vmatpush1.bf16.msra.mxu0 %v499
    %643 = vmatprep.subr.bf16.mxu0 0
    %644 = vmatpush2.bf16.msra.mxu0 %v514
    %645 = vmatprep.subr.bf16.mxu0 0
    %646 = vmatpush2.bf16.msra.mxu0 %v513
    %647 = vmatprep.subr.bf16.mxu0 0
    %648 = vmatpush2.bf16.msra.mxu0 %v512
    %649 = vmatprep.subr.bf16.mxu0 0
    %650 = vmatpush2.bf16.msra.mxu0 %v511
    %651 = vmatprep.subr.bf16.mxu0 0
    %652 = vmatpush2.bf16.msra.mxu0 %v510
    %653 = vmatprep.subr.bf16.mxu0 0
    %654 = vmatpush2.bf16.msra.mxu0 %v509
    %655 = vmatprep.subr.bf16.mxu0 0
    %656 = vmatpush2.bf16.msra.mxu0 %v508
    %657 = vmatprep.subr.bf16.mxu0 0
    %658 = vmatpush2.bf16.msra.mxu0 %v507
    %659 = vmatprep.mubr.bf16.mxu0 %v108
    %660 = vmatmul.mubr.bf16.gmra.mxu0 %v107
    %v661 = vpop.f32.mrf.mxu0
    %v662 = vadd.f32 0.0, %v661
    %v663 = vpop.f32.mrf.mxu0
    %v664 = vpop.f32.mrf.mxu0
    %v665 = vpop.f32.mrf.mxu0
    %666 = vdwg.mxu0
    %667 = vmatprep.subr.bf16.mxu0 0
    %668 = vmatpush1.bf16.msra.mxu0 %v522
    %669 = vmatprep.subr.bf16.mxu0 0
    %670 = vmatpush1.bf16.msra.mxu0 %v521
    %671 = vmatprep.subr.bf16.mxu0 0
    %672 = vmatpush1.bf16.msra.mxu0 %v520
    %673 = vmatprep.subr.bf16.mxu0 0
    %674 = vmatpush1.bf16.msra.mxu0 %v519
    %675 = vmatprep.subr.bf16.mxu0 0
    %676 = vmatpush1.bf16.msra.mxu0 %v518
    %677 = vmatprep.subr.bf16.mxu0 0
    %678 = vmatpush1.bf16.msra.mxu0 %v517
    %679 = vmatprep.subr.bf16.mxu0 0
    %680 = vmatpush1.bf16.msra.mxu0 %v516
    %681 = vmatprep.subr.bf16.mxu0 0
    %682 = vmatpush1.bf16.msra.mxu0 %v515
    %683 = vmatprep.subr.bf16.mxu0 0
    %684 = vmatpush2.bf16.msra.mxu0 %v530
    %685 = vmatprep.subr.bf16.mxu0 0
    %686 = vmatpush2.bf16.msra.mxu0 %v529
    %687 = vmatprep.subr.bf16.mxu0 0
    %688 = vmatpush2.bf16.msra.mxu0 %v528
    %689 = vmatprep.subr.bf16.mxu0 0
    %690 = vmatpush2.bf16.msra.mxu0 %v527
    %691 = vmatprep.subr.bf16.mxu0 0
    %692 = vmatpush2.bf16.msra.mxu0 %v526
    %693 = vmatprep.subr.bf16.mxu0 0
    %694 = vmatpush2.bf16.msra.mxu0 %v525
    %695 = vmatprep.subr.bf16.mxu0 0
    %696 = vmatpush2.bf16.msra.mxu0 %v524
    %697 = vmatprep.subr.bf16.mxu0 0
    %698 = vmatpush2.bf16.msra.mxu0 %v523
    %699 = vmatprep.mubr.bf16.mxu0 %v110
    %700 = vmatmul.mubr.bf16.gmra.mxu0 %v109
    %v701 = vpop.f32.mrf.mxu0
    %v702 = vadd.f32 %v662, %v701
    %v703 = vpop.f32.mrf.mxu0
    %v704 = vpop.f32.mrf.mxu0
    %v705 = vpop.f32.mrf.mxu0
    %706 = vdwg.mxu0
    %707 = vmatprep.subr.bf16.mxu0 0
    %708 = vmatpush1.bf16.msra.mxu0 %v538
    %709 = vmatprep.subr.bf16.mxu0 0
    %710 = vmatpush1.bf16.msra.mxu0 %v537
    %711 = vmatprep.subr.bf16.mxu0 0
    %712 = vmatpush1.bf16.msra.mxu0 %v536
    %713 = vmatprep.subr.bf16.mxu0 0
    %714 = vmatpush1.bf16.msra.mxu0 %v535
    %715 = vmatprep.subr.bf16.mxu0 0
    %716 = vmatpush1.bf16.msra.mxu0 %v534
    %717 = vmatprep.subr.bf16.mxu0 0
    %718 = vmatpush1.bf16.msra.mxu0 %v533
    %719 = vmatprep.subr.bf16.mxu0 0
    %720 = vmatpush1.bf16.msra.mxu0 %v532
    %721 = vmatprep.subr.bf16.mxu0 0
    %722 = vmatpush1.bf16.msra.mxu0 %v531
    %723 = vmatprep.subr.bf16.mxu0 0
    %724 = vmatpush2.bf16.msra.mxu0 %v546
    %725 = vmatprep.subr.bf16.mxu0 0
    %726 = vmatpush2.bf16.msra.mxu0 %v545
    %727 = vmatprep.subr.bf16.mxu0 0
    %728 = vmatpush2.bf16.msra.mxu0 %v544
    %729 = vmatprep.subr.bf16.mxu0 0
    %730 = vmatpush2.bf16.msra.mxu0 %v543
    %731 = vmatprep.subr.bf16.mxu0 0
    %732 = vmatpush2.bf16.msra.mxu0 %v542
    %733 = vmatprep.subr.bf16.mxu0 0
    %734 = vmatpush2.bf16.msra.mxu0 %v541
    %735 = vmatprep.subr.bf16.mxu0 0
    %736 = vmatpush2.bf16.msra.mxu0 %v540
    %737 = vmatprep.subr.bf16.mxu0 0
    %738 = vmatpush2.bf16.msra.mxu0 %v539
    %739 = vmatprep.mubr.bf16.mxu0 %v112
    %740 = vmatmul.mubr.bf16.gmra.mxu0 %v111
    %v741 = vpop.f32.mrf.mxu0
    %v742 = vadd.f32 %v702, %v741
    %v743 = vpop.f32.mrf.mxu0
    %v744 = vpop.f32.mrf.mxu0
    %v745 = vpop.f32.mrf.mxu0
    %746 = vdwg.mxu0
    %747 = vmatprep.subr.bf16.mxu0 0
    %748 = vmatpush1.bf16.msra.mxu0 %v554
    %749 = vmatprep.subr.bf16.mxu0 0
    %750 = vmatpush1.bf16.msra.mxu0 %v553
    %751 = vmatprep.subr.bf16.mxu0 0
    %752 = vmatpush1.bf16.msra.mxu0 %v552
    %753 = vmatprep.subr.bf16.mxu0 0
    %754 = vmatpush1.bf16.msra.mxu0 %v551
    %755 = vmatprep.subr.bf16.mxu0 0
    %756 = vmatpush1.bf16.msra.mxu0 %v550
    %757 = vmatprep.subr.bf16.mxu0 0
    %758 = vmatpush1.bf16.msra.mxu0 %v549
    %759 = vmatprep.subr.bf16.mxu0 0
    %760 = vmatpush1.bf16.msra.mxu0 %v548
    %761 = vmatprep.subr.bf16.mxu0 0
    %762 = vmatpush1.bf16.msra.mxu0 %v547
    %763 = vmatprep.subr.bf16.mxu0 0
    %764 = vmatpush2.bf16.msra.mxu0 %v562
    %765 = vmatprep.subr.bf16.mxu0 0
    %766 = vmatpush2.bf16.msra.mxu0 %v561
    %767 = vmatprep.subr.bf16.mxu0 0
    %768 = vmatpush2.bf16.msra.mxu0 %v560
    %769 = vmatprep.subr.bf16.mxu0 0
    %770 = vmatpush2.bf16.msra.mxu0 %v559
    %771 = vmatprep.subr.bf16.mxu0 0
    %772 = vmatpush2.bf16.msra.mxu0 %v558
    %773 = vmatprep.subr.bf16.mxu0 0
    %774 = vmatpush2.bf16.msra.mxu0 %v557
    %775 = vmatprep.subr.bf16.mxu0 0
    %776 = vmatpush2.bf16.msra.mxu0 %v556
    %777 = vmatprep.subr.bf16.mxu0 0
    %778 = vmatpush2.bf16.msra.mxu0 %v555
    %779 = vmatprep.mubr.bf16.mxu0 %v114
    %780 = vmatmul.mubr.bf16.gmra.mxu0 %v113
    %v781 = vpop.f32.mrf.mxu0
    %v782 = vadd.f32 %v742, %v781
    %v783 = vpop.f32.mrf.mxu0
    %v784 = vpop.f32.mrf.mxu0
    %v785 = vpop.f32.mrf.mxu0
    %786 = vdwg.mxu0
    %v787 = vadd.f32 %v60, %v782
    %788 = vst [vmem:[#allocation2] sm:$0x3] %v787
    // Predicated region
    $region30: #{tpu_custom_call.1} parent=1 // pred_check
      %p789 = pneg %p55
    $region31: #{tpu_custom_call.1} parent=1 // pred_check_branch
      %791 = sbr.rel (%p789) target = $region33
    $region32: #{tpu_custom_call.1} parent=1 // pred_region
      %v792 = vld [vmem:[#allocation2] sm:$0x3]
      %v793 = vmul.f32 %v792, %v792
      %vm794 = vcmask 1041408
      %v795 = vsel %vm794, %v793, 0.0
      %796 = vadd.xlane.f32.xlu0 %v795
      %v797 = vpop.xlane.xlu0 %796
      %v798 = vadd.f32 %v797, 1e-12
      %v799 = vrsqrt.pop %v798
      %v800 = vmul.f32 %v792, %v799
      %v801 = vpack.c.bf16 %v800, %v800
      %v802 = vld [vmem:[#allocation8] sm:$0xf]
      %v803 = vld [vmem:[#allocation8 + $0x4] sm:$0xf]
      %v804 = vld [vmem:[#allocation8 + $0x8] sm:$0xf]
      %v805 = vld [vmem:[#allocation8 + $0xc] sm:$0xf]
      %v806 = vld [vmem:[#allocation8 + $0x10] sm:$0xf]
      %v807 = vld [vmem:[#allocation8 + $0x14] sm:$0xf]
      %v808 = vld [vmem:[#allocation8 + $0x18] sm:$0xf]
      %v809 = vld [vmem:[#allocation8 + $0x1c] sm:$0xf]
      %v810 = vld [vmem:[#allocation8 + $0x20] sm:$0xf]
      %v811 = vld [vmem:[#allocation8 + $0x24] sm:$0xf]
      %v812 = vld [vmem:[#allocation8 + $0x28] sm:$0xf]
      %v813 = vld [vmem:[#allocation8 + $0x2c] sm:$0xf]
      %v814 = vld [vmem:[#allocation8 + $0x30] sm:$0xf]
      %v815 = vld [vmem:[#allocation8 + $0x34] sm:$0xf]
      %v816 = vld [vmem:[#allocation8 + $0x38] sm:$0xf]
      %v817 = vld [vmem:[#allocation8 + $0x3c] sm:$0xf]
      %v834 = vunpack.c.l.b16 %v802
      %v835 = vunpack.c.l.b16 %v803
      %v836 = vunpack.c.l.b16 %v804
      %v837 = vunpack.c.l.b16 %v805
      %v838 = vunpack.c.l.b16 %v806
      %v839 = vunpack.c.l.b16 %v807
      %v840 = vunpack.c.l.b16 %v808
      %v841 = vunpack.c.l.b16 %v809
      %v842 = vunpack.c.l.b16 %v810
      %v843 = vunpack.c.l.b16 %v811
      %v844 = vunpack.c.l.b16 %v812
      %v845 = vunpack.c.l.b16 %v813
      %v846 = vunpack.c.l.b16 %v814
      %v847 = vunpack.c.l.b16 %v815
      %v848 = vunpack.c.l.b16 %v816
      %v849 = vunpack.c.l.b16 %v817
      %v850 = vpack.c.b16 %v835, %v834
      %v851 = vpack.c.b16 %v837, %v836
      %v852 = vpack.c.b16 %v839, %v838
      %v853 = vpack.c.b16 %v841, %v840
      %v854 = vpack.c.b16 %v843, %v842
      %v855 = vpack.c.b16 %v845, %v844
      %v856 = vpack.c.b16 %v847, %v846
      %v857 = vpack.c.b16 %v849, %v848
      %866 = vmatprep.subr.bf16.mxu0 0
      %867 = vmatpush1.bf16.msra.mxu0 %v857
      %868 = vmatprep.subr.bf16.mxu0 0
      %869 = vmatpush1.bf16.msra.mxu0 %v856
      %870 = vmatprep.subr.bf16.mxu0 0
      %871 = vmatpush1.bf16.msra.mxu0 %v855
      %872 = vmatprep.subr.bf16.mxu0 0
      %873 = vmatpush1.bf16.msra.mxu0 %v854
      %874 = vmatprep.subr.bf16.mxu0 0
      %875 = vmatpush1.bf16.msra.mxu0 %v853
      %876 = vmatprep.subr.bf16.mxu0 0
      %877 = vmatpush1.bf16.msra.mxu0 %v852
      %878 = vmatprep.subr.bf16.mxu0 0
      %879 = vmatpush1.bf16.msra.mxu0 %v851
      %880 = vmatprep.subr.bf16.mxu0 0
      %881 = vmatpush1.bf16.msra.mxu0 %v850
      %882 = vmatprep.subr.bf16.mxu0 0
      %883 = vmatpush2.bf16.msra.mxu0 0
      %884 = vmatprep.subr.bf16.mxu0 0
      %885 = vmatpush2.bf16.msra.mxu0 0
      %886 = vmatprep.subr.bf16.mxu0 0
      %887 = vmatpush2.bf16.msra.mxu0 0
      %888 = vmatprep.subr.bf16.mxu0 0
      %889 = vmatpush2.bf16.msra.mxu0 0
      %890 = vmatprep.subr.bf16.mxu0 0
      %891 = vmatpush2.bf16.msra.mxu0 0
      %892 = vmatprep.subr.bf16.mxu0 0
      %893 = vmatpush2.bf16.msra.mxu0 0
      %894 = vmatprep.subr.bf16.mxu0 0
      %895 = vmatpush2.bf16.msra.mxu0 0
      %896 = vmatprep.subr.bf16.mxu0 0
      %897 = vmatpush2.bf16.msra.mxu0 0
      %898 = vmatprep.mubr.bf16.mxu0 0
      %899 = vmatmul.mubr.bf16.gmra.mxu0 %v801
      %v900 = vpop.f32.mrf.mxu0
      %v901 = vadd.f32 0.0, %v900
      %v902 = vpop.f32.mrf.mxu0
      %v903 = vpop.f32.mrf.mxu0
      %v904 = vpop.f32.mrf.mxu0
      %905 = vdwg.mxu0
      %906 = vst [vmem:[#allocation9] sm:$0x3] %v901
    $region33: #{tpu_custom_call.1} parent=1 // pred_fallthru
      _
    // Predicated region
    $region34: #{tpu_custom_call.1} parent=1 // pred_check
      _
    $region35: #{tpu_custom_call.1} parent=1 // pred_check_branch
      %908 = sbr.rel (0) target = $region37
    $region36: #{tpu_custom_call.1} parent=1 // pred_region
      %s910 = ssub.s32 32, 32
      %911 = vsyncadd [#allocation5], %s910
      %s913 = sshll.u32 [#allocation9], 4
      %s914 = int_to_ptr.vmem [resolvable:$true] %s913
      %916 = dma.vmem_to_hbm [thread:$0]  %s914, 32, %s3, [#allocation5]
    $region37: #{tpu_custom_call.1} parent=1 // pred_fallthru
      _
    // Predicated region
    $region38: #{tpu_custom_call.1} parent=1 // pred_check
      _
    $region39: #{tpu_custom_call.1} parent=1 // pred_check_branch
      %918 = sbr.rel (0) target = $region41
    $region40: #{tpu_custom_call.1} parent=1 // pred_region
      %919 = dma.done [#allocation5], 32
    $region41: #{tpu_custom_call.1} parent=1 // pred_fallthru
      _
    %920 = vsyncpa [#allocation4], 1
    %921 = vsyncpa [#allocation7], 1
    %922 = vsyncpa [#allocation5], 1

</llo_original>
